<compile_context>
chip_gen: v7x
topology: tpu7x:2x2x1
jax: 0.10.0
libtpu: 0.0.40
codegen_flags: <defaults>
</compile_context>

<pallas_src>
import functools

import jax
import jax.numpy as jnp
from jax.experimental import pallas as pl
from jax.experimental.pallas import tpu as pltpu


# ---------------------------------------------------------------------------
# Fused SE-gate + residual-add Pallas kernel
# ---------------------------------------------------------------------------
def _se_residual_kernel(x_ref, sc_ref, w1_ref, w2_ref, o_ref, *, inv_hw):
    # x_ref, sc_ref, o_ref : (Bt, R, L) activations, L = fold * C (lane-dense)
    # w1_ref               : (L, Cr) f32  fc1 weight, pre-transposed & fold-tiled
    # w2_ref               : (Cr, L) f32  fc2 weight, pre-transposed & fold-tiled
    x = x_ref[...]

    # AdaptiveAvgPool2d(1): f32 accumulation over the flattened spatial axis.
    # With lane-folding the per-channel mean is recovered implicitly because the
    # fc1 weight rows are replicated per spatial offset (sum_{o,c} p[o,c]*w1[c]).
    mean = jnp.sum(x, axis=1, dtype=jnp.float32) * inv_hw                 # (Bt, L)

    # fc1 (1x1 conv, no bias) + ReLU — gate math stays in f32.
    s = jnp.dot(mean, w1_ref[...], preferred_element_type=jnp.float32)    # (Bt, Cr)
    s = jnp.maximum(s, 0.0)

    # fc2 (1x1 conv, no bias) + Sigmoid; result already tiled across lanes.
    s = jnp.dot(s, w2_ref[...], preferred_element_type=jnp.float32)       # (Bt, L)
    gate = jax.nn.sigmoid(s).astype(x.dtype)[:, None, :]                  # (Bt, 1, L)

    # Scale in the activation dtype and fuse the residual add (one HBM pass).
    o_ref[...] = (x * gate + sc_ref[...]).astype(o_ref.dtype)


# ---------------------------------------------------------------------------
# Tiling / VMEM heuristics
# ---------------------------------------------------------------------------
def _vmem_budget_bytes():
    """<= 75% of per-core VMEM (v7x: ~48 MiB, v5e/v6e: ~96 MiB)."""
    try:
        cap = int(pltpu.get_tpu_info().vmem_capacity_bytes)
    except Exception:
        cap = 64 << 20  # conservative fallback = v7x per-TC capacity
    return (3 * cap) // 4


def _num_tensorcores_per_chip():
    try:
        if "v7" in jax.devices()[0].device_kind.lower():
            return 2
    except Exception:
        pass
    return 1


def _pick_batch_tile(batch, per_image_bytes, target_bytes, prefer_even_grid):
    """Largest divisor of `batch` whose block is <= target_bytes (prefer big blocks)."""
    bt = max(1, min(batch, target_bytes // max(per_image_bytes, 1)))
    while batch % bt:
        bt -= 1
    if prefer_even_grid and (batch // bt) % 2 == 1 and batch % 2 == 0:
        # v7x: prefer an even grid (2 TensorCores) only if blocks stay >= ~1 MiB.
        cand = bt - 1
        while cand >= 1:
            if batch % cand == 0 and (batch // cand) % 2 == 0:
                break
            cand -= 1
        if cand >= 1 and cand * per_image_bytes >= (1 << 20):
            bt = cand
    return bt


# ---------------------------------------------------------------------------
# Fused SE-gate + residual-add wrapper (NHWC, no transposes)
# ---------------------------------------------------------------------------
def se_scale_residual_add(res_nhwc, shortcut_nhwc, w_fc1, w_fc2):
    """out = res * SE_gate(res) + shortcut, in a single Pallas pass.

    res_nhwc, shortcut_nhwc: (B, H, W, C) channel-last activations.
    w_fc1: (Cr, C, 1, 1) PyTorch fc1 weight;  w_fc2: (C, Cr, 1, 1).
    """
    assert res_nhwc.shape == shortcut_nhwc.shape
    B, H, W, C = res_nhwc.shape
    Cr = w_fc1.shape[0]
    HW = H * W
    dtype = res_nhwc.dtype
    itemsize = jnp.dtype(dtype).itemsize

    # Lane-dense fold: for C < 128 pack `fold` spatial positions onto the
    # 128-lane axis so stores are full-width (no masked vst.msk).
    fold = 1
    if C < 128 and 128 % C == 0 and HW % (128 // C) == 0:
        fold = 128 // C
    L = fold * C
    R = HW // fold

    # Free, contiguous reshapes — data is already channel-last.
    x = res_nhwc.reshape(B, R, L)
    sc = shortcut_nhwc.reshape(B, R, L)

    # fc1/fc2 weights: transpose once and tile across the fold factor so the
    # kernel needs no unfold/roll (row (o*C + c) of w1 == w1t[c], column
    # (o*C + c) of w2 == w2t[:, c]).
    w1t = w_fc1.reshape(Cr, C).T.astype(jnp.float32)          # (C, Cr)
    w2t = w_fc2.reshape(C, Cr).T.astype(jnp.float32)          # (Cr, C)
    w1 = jnp.tile(w1t, (fold, 1))                             # (L, Cr)
    w2 = jnp.tile(w2t, (1, fold))                             # (Cr, L)

    budget = _vmem_budget_bytes()
    target_bytes = min(4 << 20, budget // 12)
    per_image_bytes = HW * C * itemsize
    bt = _pick_batch_tile(B, per_image_bytes, target_bytes,
                          prefer_even_grid=_num_tensorcores_per_chip() > 1)
    grid = (B // bt,)

    block_bytes = bt * R * L * itemsize
    w_bytes = 2 * L * Cr * 4
    # 3 tiled arrays (x, shortcut, out) x double buffering + weights + headroom,
    # clipped to the per-generation VMEM budget (limit only, not an allocation).
    vmem_bytes = int(min(budget, 6 * block_bytes + 2 * w_bytes + (4 << 20)))

    cost = pl.CostEstimate(
        flops=int(B * HW * C + 4 * B * L * Cr + 2 * B * HW * C),
        transcendentals=int(B * L),
        bytes_accessed=int(3 * B * HW * C * itemsize + w_bytes),
    )

    kernel = functools.partial(_se_residual_kernel, inv_hw=1.0 / HW)

    out = pl.pallas_call(
        kernel,
        out_shape=jax.ShapeDtypeStruct((B, R, L), dtype),
        grid_spec=pltpu.PrefetchScalarGridSpec(
            num_scalar_prefetch=0,
            grid=grid,
            in_specs=[
                pl.BlockSpec((bt, R, L), lambda b: (b, 0, 0)),
                pl.BlockSpec((bt, R, L), lambda b: (b, 0, 0)),
                pl.BlockSpec((L, Cr), lambda b: (0, 0)),
                pl.BlockSpec((Cr, L), lambda b: (0, 0)),
            ],
            out_specs=pl.BlockSpec((bt, R, L), lambda b: (b, 0, 0)),
        ),
        compiler_params=pltpu.CompilerParams(
            dimension_semantics=("parallel",),
            vmem_limit_bytes=vmem_bytes,
        ),
        cost_estimate=cost,
    )(x, sc, w1, w2)

    return out.reshape(B, H, W, C)


# ---------------------------------------------------------------------------
# XLA-side pieces of BottleNeckIrSe (convs, BN, PReLU) — all channel-last
# ---------------------------------------------------------------------------
def _conv2d_nhwc(x, w_oihw, stride, padding):
    w = jnp.transpose(w_oihw, (2, 3, 1, 0))   # OIHW -> HWIO (tiny weight reorder)
    return jax.lax.conv_general_dilated(
        x, w,
        window_strides=(stride, stride),
        padding=[(padding, padding), (padding, padding)],
        dimension_numbers=("NHWC", "HWIO", "NHWC"),
    )


def _batchnorm_nhwc(x, p, eps=1e-5):
    # TODO(synk): BatchNorm2d implemented in inference mode (running stats);
    # training-mode batch statistics / running-stat updates are not modeled.
    gamma, beta, mean, var = p
    inv = gamma * jax.lax.rsqrt(var + eps)
    return x * inv + (beta - mean * inv)       # broadcasts over trailing C axis


def _prelu_nhwc(x, a):
    return jnp.where(x >= 0, x, x * a)


def _se_residual_ref_nhwc(res, shortcut, w_fc1, w_fc2):
    Cr, C = w_fc1.shape[0], w_fc1.shape[1]
    m = jnp.mean(res.astype(jnp.float32), axis=(1, 2))
    s = jnp.maximum(jnp.dot(m, w_fc1.reshape(Cr, C).T,
                            precision=jax.lax.Precision.HIGHEST), 0.0)
    s = jax.nn.sigmoid(jnp.dot(s, w_fc2.reshape(C, Cr).T,
                               precision=jax.lax.Precision.HIGHEST))
    return res * s.astype(res.dtype)[:, None, None, :] + shortcut


def bottleneck_ir_se_forward_nhwc(x, params, stride, use_pallas=True):
    """BottleNeckIrSe.forward in channel-last layout (no relayouts anywhere)."""
    # res branch
    y = _batchnorm_nhwc(x, params["bn1"])
    y = _conv2d_nhwc(y, params["conv1_w"], stride=1, padding=1)
    y = _prelu_nhwc(y, params["prelu_a"])
    y = _conv2d_nhwc(y, params["conv2_w"], stride=stride, padding=1)
    y = _batchnorm_nhwc(y, params["bn2"])
    # shortcut branch
    if "short_w" in params:                    # in_channel != depth
        sc = _conv2d_nhwc(x, params["short_w"], stride=stride, padding=0)
        sc = _batchnorm_nhwc(sc, params["short_bn"])
    else:                                      # in_channel == depth: MaxPool2d(1, stride)
        sc = x[:, ::stride, ::stride, :]
    if use_pallas:
        return se_scale_residual_add(y, sc, params["se_w1"], params["se_w2"])
    return _se_residual_ref_nhwc(y, sc, params["se_w1"], params["se_w2"])


def bottleneck_ir_se_forward(x_nchw, params, stride, use_pallas=True):
    """PyTorch-layout (NCHW) entry point. One layout conversion at the module
    boundary only; a full ir_se network should call the NHWC version directly."""
    x = jnp.transpose(x_nchw, (0, 2, 3, 1))
    out = bottleneck_ir_se_forward_nhwc(x, params, stride, use_pallas)
    return jnp.transpose(out, (0, 3, 1, 2))


def _xavier_uniform(key, shape):
    # matches nn.init.xavier_uniform_ for Conv2d weight (out, in, kh, kw)
    fan_out = shape[0] * shape[2] * shape[3]
    fan_in = shape[1] * shape[2] * shape[3]
    limit = (6.0 / (fan_in + fan_out)) ** 0.5
    return jax.random.uniform(key, shape, jnp.float32, -limit, limit)


if __name__ == "__main__":
    B, in_channel, depth, stride = 2, 32, 64, 2
    H = W = 16
    reduction = 16
    Cr = depth // reduction

    key = jax.random.PRNGKey(0)
    ks = jax.random.split(key, 16)

    x = jax.random.normal(ks[0], (B, in_channel, H, W), jnp.float32)  # NCHW like PyTorch

    def _bn_params(k, c):
        k1, k2, k3, k4 = jax.random.split(k, 4)
        gamma = jax.random.uniform(k1, (c,), jnp.float32, 0.5, 1.5)
        beta = 0.1 * jax.random.normal(k2, (c,), jnp.float32)
        mean = 0.1 * jax.random.normal(k3, (c,), jnp.float32)
        var = jax.random.uniform(k4, (c,), jnp.float32, 0.5, 1.5)
        return (gamma, beta, mean, var)

    params = {
        "bn1": _bn_params(ks[1], in_channel),
        "conv1_w": 0.05 * jax.random.normal(ks[2], (depth, in_channel, 3, 3), jnp.float32),
        "prelu_a": jnp.full((depth,), 0.25, jnp.float32),
        "conv2_w": 0.05 * jax.random.normal(ks[3], (depth, depth, 3, 3), jnp.float32),
        "bn2": _bn_params(ks[4], depth),
        "short_w": 0.1 * jax.random.normal(ks[5], (depth, in_channel, 1, 1), jnp.float32),
        "short_bn": _bn_params(ks[6], depth),
        "se_w1": _xavier_uniform(ks[7], (Cr, depth, 1, 1)),
        "se_w2": _xavier_uniform(ks[8], (depth, Cr, 1, 1)),
    }

    out = bottleneck_ir_se_forward(x, params, stride, use_pallas=True)
    jax.block_until_ready(out)
    assert out.shape == (B, depth, H // stride, W // stride)

    # correctness check against a pure-JAX reference (same conv/BN/PReLU path)
    ref = bottleneck_ir_se_forward(x, params, stride, use_pallas=False)
    max_err = float(jnp.max(jnp.abs(out - ref)))
    assert jnp.allclose(out, ref, atol=5e-4, rtol=5e-4), max_err

    # fused kernel alone on a C >= 128 stage shape (no lane-folding path), f32.
    # Slightly looser tolerance: the reference uses Precision.HIGHEST matmuls.
    C2, Cr2, H2 = 256, 256 // reduction, 4
    y2 = jax.random.normal(ks[9], (B, H2, H2, C2), jnp.float32)
    s2 = jax.random.normal(ks[10], (B, H2, H2, C2), jnp.float32)
    w1b = _xavier_uniform(ks[11], (Cr2, C2, 1, 1))
    w2b = _xavier_uniform(ks[12], (C2, Cr2, 1, 1))
    o2 = se_scale_residual_add(y2, s2, w1b, w2b)
    r2 = _se_residual_ref_nhwc(y2, s2, w1b, w2b)
    assert jnp.allclose(o2, r2, atol=2e-3, rtol=2e-3), float(jnp.max(jnp.abs(o2 - r2)))

    # bf16 smoke run of the fused kernel (activations bf16, gate math stays f32),
    # lane-folded C=64 path.
    Ho, Wo = H // stride, W // stride
    yb = jax.random.normal(ks[13], (B, Ho, Wo, depth), jnp.bfloat16)
    sb = jax.random.normal(ks[14], (B, Ho, Wo, depth), jnp.bfloat16)
    ob = se_scale_residual_add(yb, sb, params["se_w1"], params["se_w2"])
    jax.block_until_ready(ob)

    print("KERNEL_OK")
</pallas_src>

<mosaic_0001>
module attributes {stable_mosaic.version = 11 : i64} {
  func.func @_se_residual_kernel(%arg0: i32, %arg1: memref<2x32x128xf32, #tpu.memory_space<vmem>>, %arg2: memref<2x32x128xf32, #tpu.memory_space<vmem>>, %arg3: memref<128x4xf32, #tpu.memory_space<vmem>>, %arg4: memref<4x128xf32, #tpu.memory_space<vmem>>, %arg5: memref<2x32x128xf32, #tpu.memory_space<vmem>>) attributes {dimension_semantics = [#tpu.dimension_semantics<parallel>], iteration_bounds = array<i64: 1>, scalar_prefetch = 0 : i64, scratch_operands = 0 : i64, tpu.core_type = #tpu.core_type<tc>, window_params = [{transform_indices = @transform_0, window_bounds = array<i64: 2, 32, 128>}, {transform_indices = @transform_1, window_bounds = array<i64: 2, 32, 128>}, {pipeline_mode = #tpu.pipeline_mode<synchronous>, transform_indices = @transform_2, window_bounds = array<i64: 128, 4>}, {pipeline_mode = #tpu.pipeline_mode<synchronous>, transform_indices = @transform_3, window_bounds = array<i64: 4, 128>}, {transform_indices = @transform_4, window_bounds = array<i64: 2, 32, 128>}]} {
    %c0 = arith.constant 0 : index
    %c0_0 = arith.constant 0 : index
    %c0_1 = arith.constant 0 : index
    %0 = vector.load %arg1[%c0, %c0_0, %c0_1] : memref<2x32x128xf32, #tpu.memory_space<vmem>>, vector<2x32x128xf32>
    %cst = arith.constant dense<0.000000e+00> : vector<2x128xf32>
    %1 = vector.multi_reduction <add>, %0, %cst [1] : vector<2x32x128xf32> to vector<2x128xf32>
    %cst_2 = arith.constant 1.562500e-02 : f32
    %2 = vector.broadcast %cst_2 : f32 to vector<2x128xf32>
    %3 = arith.mulf %1, %2 : vector<2x128xf32>
    %c0_3 = arith.constant 0 : index
    %c0_4 = arith.constant 0 : index
    %4 = vector.load %arg3[%c0_3, %c0_4] : memref<128x4xf32, #tpu.memory_space<vmem>>, vector<128x4xf32>
    %cst_5 = arith.constant dense<0.000000e+00> : vector<2x4xf32>
    %5 = tpu.matmul %3, %4, %cst_5 {dimension_numbers = #tpu.dot_dimension_numbers<[1], [0], [0], [1], [0, 0, 1, 1], [], []>} : vector<2x128xf32>, vector<128x4xf32>, vector<2x4xf32> -> vector<2x4xf32>
    %cst_6 = arith.constant 0.000000e+00 : f32
    %6 = vector.broadcast %cst_6 : f32 to vector<2x4xf32>
    %7 = arith.maximumf %5, %6 : vector<2x4xf32>
    %c0_7 = arith.constant 0 : index
    %c0_8 = arith.constant 0 : index
    %8 = vector.load %arg4[%c0_7, %c0_8] : memref<4x128xf32, #tpu.memory_space<vmem>>, vector<4x128xf32>
    %cst_9 = arith.constant dense<0.000000e+00> : vector<2x128xf32>
    %9 = tpu.matmul %7, %8, %cst_9 {dimension_numbers = #tpu.dot_dimension_numbers<[1], [0], [0], [1], [0, 0, 1, 1], [], []>} : vector<2x4xf32>, vector<4x128xf32>, vector<2x128xf32> -> vector<2x128xf32>
    %10 = arith.negf %9 : vector<2x128xf32>
    %11 = math.exp %10 : vector<2x128xf32>
    %cst_10 = arith.constant 1.000000e+00 : f32
    %12 = vector.broadcast %cst_10 : f32 to vector<2x128xf32>
    %13 = arith.addf %12, %11 : vector<2x128xf32>
    %14 = arith.divf %12, %13 : vector<2x128xf32>
    %15 = vector.shape_cast %14 : vector<2x128xf32> to vector<2x1x128xf32>
    %16 = vector.broadcast %15 : vector<2x1x128xf32> to vector<2x32x128xf32>
    %17 = arith.mulf %0, %16 : vector<2x32x128xf32>
    %c0_11 = arith.constant 0 : index
    %c0_12 = arith.constant 0 : index
    %c0_13 = arith.constant 0 : index
    %18 = vector.load %arg2[%c0_11, %c0_12, %c0_13] : memref<2x32x128xf32, #tpu.memory_space<vmem>>, vector<2x32x128xf32>
    %19 = arith.addf %17, %18 : vector<2x32x128xf32>
    %c0_14 = arith.constant 0 : index
    %c0_15 = arith.constant 0 : index
    %c0_16 = arith.constant 0 : index
    %20 = vector.load %arg5[%c0_14, %c0_15, %c0_16] : memref<2x32x128xf32, #tpu.memory_space<vmem>>, vector<2x32x128xf32>
    tpu.vector_store %arg5[%c0_14, %c0_15, %c0_16], %19 {strides = array<i32>} : memref<2x32x128xf32, #tpu.memory_space<vmem>>, vector<2x32x128xf32>,
    return
  }
  func.func @transform_0(%arg0: i32) -> (i32, i32, i32) {
    %c0_i32 = arith.constant 0 : i32
    %c0_i32_0 = arith.constant 0 : i32
    %c0_i32_1 = arith.constant 0 : i32
    return %arg0, %c0_i32, %c0_i32_0 : i32, i32, i32
  }
  func.func @transform_1(%arg0: i32) -> (i32, i32, i32) {
    %c0_i32 = arith.constant 0 : i32
    %c0_i32_0 = arith.constant 0 : i32
    %c0_i32_1 = arith.constant 0 : i32
    return %arg0, %c0_i32, %c0_i32_0 : i32, i32, i32
  }
  func.func @transform_2(%arg0: i32) -> (i32, i32) {
    %c0_i32 = arith.constant 0 : i32
    %c0_i32_0 = arith.constant 0 : i32
    %c0_i32_1 = arith.constant 0 : i32
    return %c0_i32, %c0_i32_0 : i32, i32
  }
  func.func @transform_3(%arg0: i32) -> (i32, i32) {
    %c0_i32 = arith.constant 0 : i32
    %c0_i32_0 = arith.constant 0 : i32
    %c0_i32_1 = arith.constant 0 : i32
    return %c0_i32, %c0_i32_0 : i32, i32
  }
  func.func @transform_4(%arg0: i32) -> (i32, i32, i32) {
    %c0_i32 = arith.constant 0 : i32
    %c0_i32_0 = arith.constant 0 : i32
    %c0_i32_1 = arith.constant 0 : i32
    return %arg0, %c0_i32, %c0_i32_0 : i32, i32, i32
  }
}

</mosaic_0001>

<llo_original>
// kernel: tpu_custom_call.1
$region0: #{tpu_custom_call.1}
  #allocation0 [shape = 'u32[]', space=smem, size = 0x4, offset = 0x4, fixed_abs, tag = 'smem constant byte address 0x4 - core index']
  #allocation1 [shape = 'u32[144,128]{1,0:T(1,128)}', space=vmem, size = 0x12000, scoped, tag = 'internal scratch']
  %s0 = inlined_call_operand.vmem [shape: f32[2,32,128], index: 0, kind: input, shape index: {}]
  %s1 = inlined_call_operand.vmem [shape: f32[2,32,128], index: 1, kind: input, shape index: {}]
  %s2 = inlined_call_operand.vmem [shape: f32[128,4], index: 2, kind: input, shape index: {}]
  %s3 = inlined_call_operand.vmem [shape: f32[4,128], index: 3, kind: input, shape index: {}]
  %s4 = inlined_call_operand.hbm [shape: f32[2,32,128], index: 4, kind: output, shape index: {}]
  %s5 = sld [smem:[#allocation0]]
  $region26: #{tpu_custom_call.1} parent=0
    _
  %s7 = ssub.s32 1, %s5
  %s8 = scalar_select 0, %s7, %s5
  $region1: #{tpu_custom_call.1} parent=0
    #allocation2 [shape = 'u8[32768]{0}', space=vmem, size = 0x8000, scoped, tag = 'output window, operand 0, single buffered']
    #allocation3 [shape = 's32[1]{0}', space=sflag, size = 0x4, scoped, tag = 'scoped memory for tpu_custom_call.1']
    %9 = vsyncpa [#allocation3], 0
    // Predicated region
    $region2: #{tpu_custom_call.1} parent=1 // pred_check
      _
    $region3: #{tpu_custom_call.1} parent=1 // pred_check_branch
      %11 = sbr.rel (0) target = $region5
    $region4: #{tpu_custom_call.1} parent=1 // pred_region
      _
    $region5: #{tpu_custom_call.1} parent=1 // pred_fallthru
      _
    // Predicated region
    $region6: #{tpu_custom_call.1} parent=1 // pred_check
      _
    $region7: #{tpu_custom_call.1} parent=1 // pred_check_branch
      %13 = sbr.rel (0) target = $region9
    $region8: #{tpu_custom_call.1} parent=1 // pred_region
      _
    $region9: #{tpu_custom_call.1} parent=1 // pred_fallthru
      _
    // Predicated region
    $region10: #{tpu_custom_call.1} parent=1 // pred_check
      _
    $region11: #{tpu_custom_call.1} parent=1 // pred_check_branch
      %15 = sbr.rel (0) target = $region13
    $region12: #{tpu_custom_call.1} parent=1 // pred_region
      _
    $region13: #{tpu_custom_call.1} parent=1 // pred_fallthru
      _
    // Predicated region
    $region14: #{tpu_custom_call.1} parent=1 // pred_check
      _
    $region15: #{tpu_custom_call.1} parent=1 // pred_check_branch
      %17 = sbr.rel (0) target = $region17
    $region16: #{tpu_custom_call.1} parent=1 // pred_region
      _
    $region17: #{tpu_custom_call.1} parent=1 // pred_fallthru
      _
    %v18 = vld [vmem:[%s0] sm:$0xff]
    %v19 = vld [vmem:[%s0 + $0x8] sm:$0xff]
    %v20 = vld [vmem:[%s0 + $0x10] sm:$0xff]
    %v21 = vld [vmem:[%s0 + $0x18] sm:$0xff]
    %v22 = vld [vmem:[%s0 + $0x20] sm:$0xff]
    %v23 = vld [vmem:[%s0 + $0x28] sm:$0xff]
    %v24 = vld [vmem:[%s0 + $0x30] sm:$0xff]
    %v25 = vld [vmem:[%s0 + $0x38] sm:$0xff]
    %v26 = vadd.f32 %v18, %v19
    %v27 = vadd.f32 %v26, %v20
    %v28 = vadd.f32 %v27, %v21
    %v29 = vrot.slane %v28, 4
    %v30 = vadd.f32 %v28, %v29
    %v31 = vrot.slane %v30, 2
    %v32 = vadd.f32 %v30, %v31
    %v33 = vrot.slane %v32, 1
    %v34 = vadd.f32 %v32, %v33
    %v35 = vadd.f32 %v22, %v23
    %v36 = vadd.f32 %v35, %v24
    %v37 = vadd.f32 %v36, %v25
    %v38 = vrot.slane %v37, 4
    %v39 = vadd.f32 %v37, %v38
    %v40 = vrot.slane %v39, 2
    %v41 = vadd.f32 %v39, %v40
    %v42 = vrot.slane %v41, 1
    %v43 = vadd.f32 %v41, %v42
    %v44 = vmul.f32 %v34, 0.015625
    %v45 = vmul.f32 %v43, 0.015625
    %v46 = vld [vmem:[%s2] sm:$0xff]
    %v47 = vld [vmem:[%s2 + $0x8] sm:$0xff]
    %v48 = vld [vmem:[%s2 + $0x10] sm:$0xff]
    %v49 = vld [vmem:[%s2 + $0x18] sm:$0xff]
    %v50 = vld [vmem:[%s2 + $0x20] sm:$0xff]
    %v51 = vld [vmem:[%s2 + $0x28] sm:$0xff]
    %v52 = vld [vmem:[%s2 + $0x30] sm:$0xff]
    %v53 = vld [vmem:[%s2 + $0x38] sm:$0xff]
    %v54 = vld [vmem:[%s2 + $0x40] sm:$0xff]
    %v55 = vld [vmem:[%s2 + $0x48] sm:$0xff]
    %v56 = vld [vmem:[%s2 + $0x50] sm:$0xff]
    %v57 = vld [vmem:[%s2 + $0x58] sm:$0xff]
    %v58 = vld [vmem:[%s2 + $0x60] sm:$0xff]
    %v59 = vld [vmem:[%s2 + $0x68] sm:$0xff]
    %v60 = vld [vmem:[%s2 + $0x70] sm:$0xff]
    %v61 = vld [vmem:[%s2 + $0x78] sm:$0xff]
    %vm64 = vcmask 1041409
    %v65 = vsel %vm64, %v45, %v44
    %67 = vmatprep.subr.mxu0 0.0
    %68 = vmatpush1.msra.mxu0 %v46
    %69 = vmatprep.subr.mxu0 0.0
    %70 = vmatpush1.msra.mxu0 %v47
    %71 = vmatprep.subr.mxu0 0.0
    %72 = vmatpush1.msra.mxu0 %v48
    %73 = vmatprep.subr.mxu0 0.0
    %74 = vmatpush1.msra.mxu0 %v49
    %75 = vmatprep.subr.mxu0 0.0
    %76 = vmatpush1.msra.mxu0 %v50
    %77 = vmatprep.subr.mxu0 0.0
    %78 = vmatpush1.msra.mxu0 %v51
    %79 = vmatprep.subr.mxu0 0.0
    %80 = vmatpush1.msra.mxu0 %v52
    %81 = vmatprep.subr.mxu0 0.0
    %82 = vmatpush1.msra.mxu0 %v53
    %83 = vmatprep.subr.mxu0 0.0
    %84 = vmatpush1.msra.mxu0 %v54
    %85 = vmatprep.subr.mxu0 0.0
    %86 = vmatpush1.msra.mxu0 %v55
    %87 = vmatprep.subr.mxu0 0.0
    %88 = vmatpush1.msra.mxu0 %v56
    %89 = vmatprep.subr.mxu0 0.0
    %90 = vmatpush1.msra.mxu0 %v57
    %91 = vmatprep.subr.mxu0 0.0
    %92 = vmatpush1.msra.mxu0 %v58
    %93 = vmatprep.subr.mxu0 0.0
    %94 = vmatpush1.msra.mxu0 %v59
    %95 = vmatprep.subr.mxu0 0.0
    %96 = vmatpush1.msra.mxu0 %v60
    %97 = vmatprep.subr.mxu0 0.0
    %98 = vmatpush1.msra.mxu0 %v61
    %99 = vmatprep.subr.mxu0 0.0
    %100 = vmatpush1.msra.mxu0 0.0
    %101 = vmatprep.subr.mxu0 0.0
    %102 = vmatpush1.msra.mxu0 0.0
    %103 = vmatprep.subr.mxu0 0.0
    %104 = vmatpush1.msra.mxu0 0.0
    %105 = vmatprep.subr.mxu0 0.0
    %106 = vmatpush1.msra.mxu0 0.0
    %107 = vmatprep.subr.mxu0 0.0
    %108 = vmatpush1.msra.mxu0 0.0
    %109 = vmatprep.subr.mxu0 0.0
    %110 = vmatpush1.msra.mxu0 0.0
    %111 = vmatprep.subr.mxu0 0.0
    %112 = vmatpush1.msra.mxu0 0.0
    %113 = vmatprep.subr.mxu0 0.0
    %114 = vmatpush1.msra.mxu0 0.0
    %115 = vmatprep.subr.mxu0 0.0
    %116 = vmatpush1.msra.mxu0 0.0
    %117 = vmatprep.subr.mxu0 0.0
    %118 = vmatpush1.msra.mxu0 0.0
    %119 = vmatprep.subr.mxu0 0.0
    %120 = vmatpush1.msra.mxu0 0.0
    %121 = vmatprep.subr.mxu0 0.0
    %122 = vmatpush1.msra.mxu0 0.0
    %123 = vmatprep.subr.mxu0 0.0
    %124 = vmatpush1.msra.mxu0 0.0
    %125 = vmatprep.subr.mxu0 0.0
    %126 = vmatpush1.msra.mxu0 0.0
    %127 = vmatprep.subr.mxu0 0.0
    %128 = vmatpush1.msra.mxu0 0.0
    %129 = vmatprep.subr.mxu0 0.0
    %130 = vmatpush1.msra.mxu0 0.0
    %131 = vmatprep.mubr.f32.mxu0 0.0
    %132 = vmatmul.mubr.f32.gmra.mrb[0].mxu0 %v65
    %v133 = vpop.f32.mrb[0].mxu0
    %v134 = vadd.f32 0.0, %v133
    %v135 = vpop.f32.mrb[0].mxu0
    %136 = vdwg.mxu0
    %v137 = vmax.f32 %v134, 0.0
    %v138 = vld [vmem:[%s3] sm:$0xf]
    %vm139 = vcmask 31744
    %v141 = vsel %vm139, %v137, 0
    %vm143 = vcmask 1043456
    %v145 = vsel %vm143, %v138, 0
    %147 = vmatprep.subr.mxu0 0.0
    %148 = vmatpush1.msra.mxu0 %v145
    %149 = vmatprep.subr.mxu0 0.0
    %150 = vmatpush1.msra.mxu0 0.0
    %151 = vmatprep.subr.mxu0 0.0
    %152 = vmatpush1.msra.mxu0 0.0
    %153 = vmatprep.subr.mxu0 0.0
    %154 = vmatpush1.msra.mxu0 0.0
    %155 = vmatprep.subr.mxu0 0.0
    %156 = vmatpush1.msra.mxu0 0.0
    %157 = vmatprep.subr.mxu0 0.0
    %158 = vmatpush1.msra.mxu0 0.0
    %159 = vmatprep.subr.mxu0 0.0
    %160 = vmatpush1.msra.mxu0 0.0
    %161 = vmatprep.subr.mxu0 0.0
    %162 = vmatpush1.msra.mxu0 0.0
    %163 = vmatprep.subr.mxu0 0.0
    %164 = vmatpush1.msra.mxu0 0.0
    %165 = vmatprep.subr.mxu0 0.0
    %166 = vmatpush1.msra.mxu0 0.0
    %167 = vmatprep.subr.mxu0 0.0
    %168 = vmatpush1.msra.mxu0 0.0
    %169 = vmatprep.subr.mxu0 0.0
    %170 = vmatpush1.msra.mxu0 0.0
    %171 = vmatprep.subr.mxu0 0.0
    %172 = vmatpush1.msra.mxu0 0.0
    %173 = vmatprep.subr.mxu0 0.0
    %174 = vmatpush1.msra.mxu0 0.0
    %175 = vmatprep.subr.mxu0 0.0
    %176 = vmatpush1.msra.mxu0 0.0
    %177 = vmatprep.subr.mxu0 0.0
    %178 = vmatpush1.msra.mxu0 0.0
    %179 = vmatprep.subr.mxu0 0.0
    %180 = vmatpush1.msra.mxu0 0.0
    %181 = vmatprep.subr.mxu0 0.0
    %182 = vmatpush1.msra.mxu0 0.0
    %183 = vmatprep.subr.mxu0 0.0
    %184 = vmatpush1.msra.mxu0 0.0
    %185 = vmatprep.subr.mxu0 0.0
    %186 = vmatpush1.msra.mxu0 0.0
    %187 = vmatprep.subr.mxu0 0.0
    %188 = vmatpush1.msra.mxu0 0.0
    %189 = vmatprep.subr.mxu0 0.0
    %190 = vmatpush1.msra.mxu0 0.0
    %191 = vmatprep.subr.mxu0 0.0
    %192 = vmatpush1.msra.mxu0 0.0
    %193 = vmatprep.subr.mxu0 0.0
    %194 = vmatpush1.msra.mxu0 0.0
    %195 = vmatprep.subr.mxu0 0.0
    %196 = vmatpush1.msra.mxu0 0.0
    %197 = vmatprep.subr.mxu0 0.0
    %198 = vmatpush1.msra.mxu0 0.0
    %199 = vmatprep.subr.mxu0 0.0
    %200 = vmatpush1.msra.mxu0 0.0
    %201 = vmatprep.subr.mxu0 0.0
    %202 = vmatpush1.msra.mxu0 0.0
    %203 = vmatprep.subr.mxu0 0.0
    %204 = vmatpush1.msra.mxu0 0.0
    %205 = vmatprep.subr.mxu0 0.0
    %206 = vmatpush1.msra.mxu0 0.0
    %207 = vmatprep.subr.mxu0 0.0
    %208 = vmatpush1.msra.mxu0 0.0
    %209 = vmatprep.subr.mxu0 0.0
    %210 = vmatpush1.msra.mxu0 0.0
    %211 = vmatprep.mubr.f32.mxu0 0.0
    %212 = vmatmul.mubr.f32.gmra.mrb[0].mxu0 %v141
    %v213 = vpop.f32.mrb[0].mxu0
    %v214 = vadd.f32 0.0, %v213
    %v215 = vpop.f32.mrb[0].mxu0
    %216 = vdwg.mxu0
    %v217 = vxor.u32 %v214, 2147483648
    %v218 = vmul.f32 %v217, 1.442695
    %v219 = vpow.pop %v218
    %v220 = vadd.f32 %v219, 1.0
    %v221 = vrcp.pop %v220
    %v222 = vmul.f32 1.0, %v221
    %v225 = vunpack.c.l.s4 1966171168
    %v226 = vunpack.c.0.s8 %v225
    %v227 = vlaneseq
    %v228 = vshrl.u32 %v227, 7
    %v229 = vsub.s32 %v226, %v228
    %v230 = vrot.slane %v222, %v229
    %v231 = vcombine.high %v230, %v230
    %v233 = vunpack.c.l.s4 1966171168
    %v234 = vunpack.c.0.s8 %v233
    %v235 = vlaneseq
    %v236 = vshrl.u32 %v235, 7
    %v237 = vsub.s32 %v234, %v236
    %v238 = vrot.slane %v230, %v237
    %v240 = vunpack.c.l.s4 1966171168
    %v241 = vunpack.c.0.s8 %v240
    %v242 = vlaneseq
    %v243 = vshrl.u32 %v242, 7
    %v244 = vsub.s32 %v241, %v243
    %v245 = vrot.slane %v231, %v244
    %v246 = vlaneseq
    %v247 = vshrl.u32 %v246, 7
    %v248 = vsub.s32 0, %v247
    %v249 = vrot.slane %v238, %v248
    %v250 = vlaneseq
    %v251 = vshrl.u32 %v250, 7
    %v252 = vsub.s32 0, %v251
    %v253 = vrot.slane %v245, %v252
    %v256 = vmul.f32 %v18, %v249
    %v257 = vmul.f32 %v19, %v249
    %v258 = vmul.f32 %v20, %v249
    %v259 = vmul.f32 %v21, %v249
    %v260 = vmul.f32 %v22, %v253
    %v261 = vmul.f32 %v23, %v253
    %v262 = vmul.f32 %v24, %v253
    %v263 = vmul.f32 %v25, %v253
    %v264 = vld [vmem:[%s1] sm:$0xff]
    %v265 = vld [vmem:[%s1 + $0x8] sm:$0xff]
    %v266 = vld [vmem:[%s1 + $0x10] sm:$0xff]
    %v267 = vld [vmem:[%s1 + $0x18] sm:$0xff]
    %v268 = vld [vmem:[%s1 + $0x20] sm:$0xff]
    %v269 = vld [vmem:[%s1 + $0x28] sm:$0xff]
    %v270 = vld [vmem:[%s1 + $0x30] sm:$0xff]
    %v271 = vld [vmem:[%s1 + $0x38] sm:$0xff]
    %v272 = vadd.f32 %v256, %v264
    %v273 = vadd.f32 %v257, %v265
    %v274 = vadd.f32 %v258, %v266
    %v275 = vadd.f32 %v259, %v267
    %v276 = vadd.f32 %v260, %v268
    %v277 = vadd.f32 %v261, %v269
    %v278 = vadd.f32 %v262, %v270
    %v279 = vadd.f32 %v263, %v271
    %280 = vst [vmem:[#allocation2] sm:$0xff] %v272
    %281 = vst [vmem:[#allocation2 + $0x8] sm:$0xff] %v273
    %282 = vst [vmem:[#allocation2 + $0x10] sm:$0xff] %v274
    %283 = vst [vmem:[#allocation2 + $0x18] sm:$0xff] %v275
    %284 = vst [vmem:[#allocation2 + $0x20] sm:$0xff] %v276
    %285 = vst [vmem:[#allocation2 + $0x28] sm:$0xff] %v277
    %286 = vst [vmem:[#allocation2 + $0x30] sm:$0xff] %v278
    %287 = vst [vmem:[#allocation2 + $0x38] sm:$0xff] %v279
    // Predicated region
    $region18: #{tpu_custom_call.1} parent=1 // pred_check
      _
    $region19: #{tpu_custom_call.1} parent=1 // pred_check_branch
      %289 = sbr.rel (0) target = $region21
    $region20: #{tpu_custom_call.1} parent=1 // pred_region
      %s291 = ssub.s32 1024, 1024
      %292 = vsyncadd [#allocation3], %s291
      %s293 = sshll.u32 [#allocation2], 4
      %s294 = int_to_ptr.vmem [resolvable:$true] %s293
      %299 = dma.vmem_to_hbm [thread:$0]  %s294, 1024, %s4, [#allocation3], 128, 128, 8
    $region21: #{tpu_custom_call.1} parent=1 // pred_fallthru
      _
    // Predicated region
    $region22: #{tpu_custom_call.1} parent=1 // pred_check
      _
    $region23: #{tpu_custom_call.1} parent=1 // pred_check_branch
      %301 = sbr.rel (0) target = $region25
    $region24: #{tpu_custom_call.1} parent=1 // pred_region
      %302 = dma.done [#allocation3], 1024
    $region25: #{tpu_custom_call.1} parent=1 // pred_fallthru
      _
    %303 = vsyncpa [#allocation3], 1

</llo_original>
